<compile_context>
chip_gen: v5e
topology: v5e:2x2
jax: 0.10.0
libtpu: 0.0.40
codegen_flags: <defaults>
</compile_context>

<pallas_src>
import jax
import jax.numpy as jnp
from jax.experimental import pallas as pl
from jax.experimental.pallas import tpu as pltpu

_LANES = 128
_SUBLANE = 8
_ROW_TILE_TARGET = 512  # sublanes per block; >=512 keeps DMA near HBM roofline


def _round_up(x: int, m: int) -> int:
    return ((x + m - 1) // m) * m


def _pooling_kernel(x_ref, o_ref):
    # x_ref: (1, H, rows_blk, 128) VMEM tile;  o_ref: (1, rows_blk, 128).
    # Mean over head axis (axis=1): H-1 vreg adds + one scalar-const multiply.
    h = x_ref.shape[1]
    x = x_ref[...].astype(jnp.float32)
    o_ref[...] = (jnp.sum(x, axis=1) * (1.0 / h)).astype(o_ref.dtype)


def pooling(x: jax.Array, n_head: int) -> jax.Array:
    """AvgPool1d(kernel_size=n_head) over the head axis of (B, H, T, P)."""
    B, H, T, P = x.shape
    assert H == n_head, "Pooling module assumes number of heads == n_head"

    TP = T * P

    # Lane-dense repacking: flatten (T, P) -> TP, pad to a multiple of 128
    # lanes, and view the flat axis as (rows, 128).
    rows_needed = -(-TP // _LANES)  # ceil
    if rows_needed <= _ROW_TILE_TARGET:
        block_rows = _round_up(max(rows_needed, 1), _SUBLANE)
        rows_padded = block_rows
    else:
        block_rows = _ROW_TILE_TARGET
        rows_padded = _round_up(rows_needed, block_rows)
    grid_rows = rows_padded // block_rows

    flat_padded = rows_padded * _LANES
    x_flat = x.reshape(B, H, TP)
    if flat_padded != TP:
        x_flat = jnp.pad(x_flat, ((0, 0), (0, 0), (0, flat_padded - TP)))
    x_tiled = x_flat.reshape(B, H, rows_padded, _LANES)

    out_tiled = pl.pallas_call(
        _pooling_kernel,
        out_shape=jax.ShapeDtypeStruct((B, rows_padded, _LANES), x.dtype),
        grid_spec=pltpu.PrefetchScalarGridSpec(
            num_scalar_prefetch=0,
            grid=(B, grid_rows),
            in_specs=[
                pl.BlockSpec((1, H, block_rows, _LANES),
                             lambda b, r: (b, 0, r, 0)),
            ],
            out_specs=pl.BlockSpec((1, block_rows, _LANES),
                                   lambda b, r: (b, r, 0)),
        ),
        compiler_params=pltpu.CompilerParams(
            dimension_semantics=("parallel", "parallel"),
        ),
    )(x_tiled)

    # Strip padding and restore (B, T, P).
    out_flat = out_tiled.reshape(B, flat_padded)[:, :TP]
    return out_flat.reshape(B, T, P)


def pooling_ref(x: jax.Array, n_head: int) -> jax.Array:
    """Pure-JAX reference mirroring the PyTorch forward exactly."""
    B, H, T, P = x.shape
    xr = x.reshape(B, H, T * P).transpose(0, 2, 1)                    # (B, T*P, H)
    pooled = xr.reshape(B, T * P, H // n_head, n_head).mean(axis=-1)  # (B, T*P, 1)
    return pooled.squeeze().reshape(B, T, P)


if __name__ == "__main__":
    key = jax.random.PRNGKey(0)
    B, n_head, T, P = 2, 4, 8, 16
    x = jax.random.normal(key, (B, n_head, T, P), dtype=jnp.float32)

    out = pooling(x, n_head)
    out = jax.block_until_ready(out)

    ref = pooling_ref(x, n_head)
    assert out.shape == (B, T, P), out.shape
    assert jnp.allclose(out, ref, atol=1e-6, rtol=1e-6), "mismatch vs reference"

    print("KERNEL_OK")
</pallas_src>

<mosaic_0001>
module attributes {stable_mosaic.version = 11 : i64} {
  func.func @_pooling_kernel(%arg0: i32, %arg1: i32, %arg2: memref<1x4x8x128xf32, #tpu.memory_space<vmem>>, %arg3: memref<1x8x128xf32, #tpu.memory_space<vmem>>) attributes {dimension_semantics = [#tpu.dimension_semantics<parallel>, #tpu.dimension_semantics<parallel>], iteration_bounds = array<i64: 2, 1>, scalar_prefetch = 0 : i64, scratch_operands = 0 : i64, tpu.core_type = #tpu.core_type<tc>, window_params = [{transform_indices = @transform_0, window_bounds = array<i64: 1, 4, 8, 128>}, {transform_indices = @transform_1, window_bounds = array<i64: 1, 8, 128>}]} {
    %c0 = arith.constant 0 : index
    %c0_0 = arith.constant 0 : index
    %c0_1 = arith.constant 0 : index
    %c0_2 = arith.constant 0 : index
    %0 = vector.load %arg2[%c0, %c0_0, %c0_1, %c0_2] : memref<1x4x8x128xf32, #tpu.memory_space<vmem>>, vector<1x4x8x128xf32>
    %cst = arith.constant dense<0.000000e+00> : vector<1x8x128xf32>
    %1 = vector.multi_reduction <add>, %0, %cst [1] : vector<1x4x8x128xf32> to vector<1x8x128xf32>
    %cst_3 = arith.constant 2.500000e-01 : f32
    %2 = vector.broadcast %cst_3 : f32 to vector<1x8x128xf32>
    %3 = arith.mulf %1, %2 : vector<1x8x128xf32>
    %c0_4 = arith.constant 0 : index
    %c0_5 = arith.constant 0 : index
    %c0_6 = arith.constant 0 : index
    %4 = vector.load %arg3[%c0_4, %c0_5, %c0_6] : memref<1x8x128xf32, #tpu.memory_space<vmem>>, vector<1x8x128xf32>
    tpu.vector_store %arg3[%c0_4, %c0_5, %c0_6], %3 {strides = array<i32>} : memref<1x8x128xf32, #tpu.memory_space<vmem>>, vector<1x8x128xf32>,
    return
  }
  func.func @transform_0(%arg0: i32, %arg1: i32) -> (i32, i32, i32, i32) {
    %c0_i32 = arith.constant 0 : i32
    %c0_i32_0 = arith.constant 0 : i32
    %c0_i32_1 = arith.constant 0 : i32
    return %arg0, %c0_i32, %arg1, %c0_i32_0 : i32, i32, i32, i32
  }
  func.func @transform_1(%arg0: i32, %arg1: i32) -> (i32, i32, i32) {
    %c0_i32 = arith.constant 0 : i32
    %c0_i32_0 = arith.constant 0 : i32
    return %arg0, %arg1, %c0_i32 : i32, i32, i32
  }
}

</mosaic_0001>

<llo_original>
// kernel: tpu_custom_call.1
$region0: #{tpu_custom_call.1}
  #allocation0 [shape = 'u32[]', space=smem, size = 0x4, offset = 0x4, fixed_abs, tag = 'smem constant byte address 0x4 - core index']
  #allocation1 [shape = 'u32[72,128]{1,0:T(1,128)}', space=vmem, size = 0x9000, scoped, tag = 'internal scratch']
  %s0 = inlined_call_operand.hbm [shape: f32[2,4,8,128], index: 0, kind: input, shape index: {}]
  %s1 = inlined_call_operand.hbm [shape: f32[2,8,128], index: 1, kind: output, shape index: {}]
  %s2 = sld [smem:[#allocation0]]
  $region41: #{tpu_custom_call.1} parent=0
    _
  %s4 = ssub.s32 1, %s2
  %s5 = scalar_select 0, %s4, %s2
  $region1: #{tpu_custom_call.1} parent=0
    #allocation2 [shape = 'u8[32768]{0}', space=vmem, size = 0x8000, scoped, tag = 'input window, operand 0']
    #allocation3 [shape = 's32[2]{0}', space=sflag, size = 0x8, scoped, tag = 'scoped memory for tpu_custom_call.1']
    #allocation4 [shape = 's32[2]{0}', space=sflag, size = 0x8, scoped, tag = 'scoped memory for tpu_custom_call.1']
    #allocation5 [shape = 'u8[8192]{0}', space=vmem, size = 0x2000, scoped, tag = 'output window, operand 0']
    %6 = vsyncpa [#allocation3], 0
    %s7 = scalar_lea.sflag [#allocation3], 1
    %8 = vsyncpa %s7, 0
    %9 = vsyncpa [#allocation4], 0
    %s10 = scalar_lea.sflag [#allocation4], 1
    %11 = vsyncpa %s10, 0
    loop: start=0, step=1, limit=4
    $region2: #{tpu_custom_call.1} parent=1 // loop_pre_header
      _
    $region3: #{tpu_custom_call.1} parent=1 // loop_header
      %s13 = sphi 0, %s17
      %p14 = scmp.ge.s32.totalorder %s13, 4
      %s20 = sphi 0, %s32
      %s21 = sphi 0, %s28
      %s22 = sphi 0, %s20
      %s23 = sphi 0, %s21
      %s24 = sphi 0, %s22
      %s25 = sphi 0, %s23
      %s37 = sphi 0, %s39
      %s40 = sphi 0, %s37
      %s41 = sphi 0, %s40
      %s57 = sphi 0, %s41
      %s65 = sphi 0, %s67
      %s68 = sphi 0, %s65
      %s69 = sphi 0, %s68
      %s85 = sphi 0, %s69
    $region4: #{tpu_custom_call.1} parent=1 // loop_header_branch
      %16 = sbr.rel (%p14) target = $region8
    $region5: #{tpu_custom_call.1} parent=1 // loop_body
      %s18 = ssub.s32 %s13, 1
      %s19 = ssub.s32 %s13, 2
      %s26 = sadd.s32 1, %s21
      %p27 = scmp.ge.s32.totalorder %s26, 1
      %s28 = scalar_select %p27, 0, %s26
      %s29 = sadd.s32 1, %s20
      %s30 = scalar_select %p27, %s29, %s20
      %p31 = scmp.ge.s32.totalorder %s30, 2
      %s32 = scalar_select %p31, 0, %s30
      %s33 = ssub.s32 %s20, %s32
      %s34 = ssub.s32 %s21, %s28
      %s35 = sor.u32 %s33, %s34
      %p36 = scmp.eq.s32.totalorder %s35, 0
      %s38 = sadd.s32 %s37, 1
      %s39 = scalar_select %p36, %s37, %s38
      %p42 = pneg %p36
      %p43 = scmp.eq.s32.totalorder %s13, 1
      %p44 = por %p42, %p43
      %p45 = scmp.ne.s32.totalorder %s37, %s40
      %p46 = scmp.eq.s32.totalorder %s13, 0
      %p47 = por %p45, %p46
      %p48 = scmp.ne.s32.totalorder %s37, %s40
      %p49 = scmp.eq.s32.totalorder %s18, 1
      %p50 = por %p48, %p49
      %p51 = scmp.ne.s32.totalorder %s40, %s41
      %p52 = scmp.eq.s32.totalorder %s18, 0
      %p53 = por %p51, %p52
      %p54 = scmp.ne.s32.totalorder %s40, %s41
      %p55 = scmp.eq.s32.totalorder %s19, 1
      %p56 = por %p54, %p55
      %p58 = scmp.ne.s32.totalorder %s41, %s57
      %p59 = scmp.eq.s32.totalorder %s19, 0
      %p60 = por %p58, %p59
      %s61 = ssub.s32 %s20, %s32
      %s62 = ssub.s32 %s21, %s28
      %s63 = sor.u32 %s61, %s62
      %p64 = scmp.eq.s32.totalorder %s63, 0
      %s66 = sadd.s32 %s65, 1
      %s67 = scalar_select %p64, %s65, %s66
      %p70 = pneg %p64
      %p71 = scmp.eq.s32.totalorder %s13, 1
      %p72 = por %p70, %p71
      %p73 = scmp.ne.s32.totalorder %s65, %s68
      %p74 = scmp.eq.s32.totalorder %s13, 0
      %p75 = por %p73, %p74
      %p76 = scmp.ne.s32.totalorder %s65, %s68
      %p77 = scmp.eq.s32.totalorder %s18, 1
      %p78 = por %p76, %p77
      %p79 = scmp.ne.s32.totalorder %s68, %s69
      %p80 = scmp.eq.s32.totalorder %s18, 0
      %p81 = por %p79, %p80
      %p82 = scmp.ne.s32.totalorder %s68, %s69
      %p83 = scmp.eq.s32.totalorder %s19, 1
      %p84 = por %p82, %p83
      %p86 = scmp.ne.s32.totalorder %s69, %s85
      %p87 = scmp.eq.s32.totalorder %s19, 0
      %p88 = por %p86, %p87
      %p89 = scmp.le.s32.totalorder 1, %s13
      %p90 = scmp.lt.s32.totalorder %s13, 3
      %p91 = pnand %p89, %p90
      %p92 = pneg %p91
      // Predicated region
      $region9: #{tpu_custom_call.1} parent=5 // pred_check
        _
      $region10: #{tpu_custom_call.1} parent=5 // pred_check_branch
        %94 = sbr.rel (%p91) target = $region12
      $region11: #{tpu_custom_call.1} parent=5 // pred_region
        %s95 = ssub.s32 %s13, 1
      $region12: #{tpu_custom_call.1} parent=5 // pred_fallthru
        _
      %p96 = scmp.lt.s32.totalorder %s13, 2
      // Predicated region
      $region13: #{tpu_custom_call.1} parent=5 // pred_check
        %p97 = pneg %p96
      $region14: #{tpu_custom_call.1} parent=5 // pred_check_branch
        %99 = sbr.rel (%p97) target = $region16
      $region15: #{tpu_custom_call.1} parent=5 // pred_region
        // Predicated region
        $region17: #{tpu_custom_call.1} parent=15 // pred_check
          %p100 = pneg %p47
        $region18: #{tpu_custom_call.1} parent=15 // pred_check_branch
          %102 = sbr.rel (%p100) target = $region20
        $region19: #{tpu_custom_call.1} parent=15 // pred_region
          %s103 = sand.u32 %s37, 1
          %s104 = scalar_lea.sflag [#allocation3], %s103
          %s105 = sand.u32 %s37, 1
          %s106 = smul.addr %s105, 32
          %s107 = scalar_lea.vmem [#allocation2], %s106
          %109 = vsyncadd %s104, 0
          %s110 = smul.addr %s20, 4
          %s111 = sadd.s32 %s21, %s110
          %s112 = smul.addr %s111, 8
          %s113 = scalar_lea.hbm %s0, %s112
          %s114 = sshll.u32 %s113, 4
          %s115 = int_to_ptr.hbm [resolvable:$true] %s114
          %s116 = sshll.u32 %s107, 4
          %s117 = int_to_ptr.vmem [resolvable:$true] %s116
          %122 = dma.hbm_to_vmem [thread:$0]  %s115, 512, %s117, %s104, 128, 128, 8
        $region20: #{tpu_custom_call.1} parent=15 // pred_fallthru
          _
      $region16: #{tpu_custom_call.1} parent=5 // pred_fallthru
        _
      %p123 = scmp.le.s32.totalorder 1, %s13
      %p124 = scmp.lt.s32.totalorder %s13, 3
      %p125 = pnand %p123, %p124
      %p126 = pneg %p125
      // Predicated region
      $region21: #{tpu_custom_call.1} parent=5 // pred_check
        _
      $region22: #{tpu_custom_call.1} parent=5 // pred_check_branch
        %128 = sbr.rel (%p125) target = $region24
      $region23: #{tpu_custom_call.1} parent=5 // pred_region
        %s129 = ssub.s32 %s13, 1
        %s130 = sand.u32 %s40, 1
        %s131 = scalar_lea.sflag [#allocation3], %s130
        %s132 = sand.u32 %s40, 1
        %s133 = smul.addr %s132, 32
        %s134 = scalar_lea.vmem [#allocation2], %s133
        // Predicated region
        $region25: #{tpu_custom_call.1} parent=23 // pred_check
          %p135 = pneg %p53
        $region26: #{tpu_custom_call.1} parent=23 // pred_check_branch
          %137 = sbr.rel (%p135) target = $region28
        $region27: #{tpu_custom_call.1} parent=23 // pred_region
          %139 = dma.done %s131, 512
        $region28: #{tpu_custom_call.1} parent=23 // pred_fallthru
          _
        %s140 = sand.u32 %s40, 1
        %s141 = scalar_lea.sflag [#allocation3], %s140
        %s142 = sand.u32 %s40, 1
        %s143 = smul.addr %s142, 32
        %s144 = scalar_lea.vmem [#allocation2], %s143
        %p145 = pneg %p53
        %p146 = pneg %p50
        %p147 = pneg %p81
        %p148 = pneg %p78
        %s149 = sand.u32 %s68, 1
        %s150 = scalar_lea.sflag [#allocation4], %s149
        %s151 = sand.u32 %s68, 1
        %s152 = smul.addr %s151, 8
        %s153 = scalar_lea.vmem [#allocation5], %s152
        %v154 = vld [vmem:[%s134] sm:$0xff]
        %v155 = vld [vmem:[%s134 + $0x8] sm:$0xff]
        %v156 = vld [vmem:[%s134 + $0x10] sm:$0xff]
        %v157 = vld [vmem:[%s134 + $0x18] sm:$0xff]
        %v158 = vadd.f32 %v154, %v155
        %v159 = vadd.f32 %v158, %v156
        %v160 = vadd.f32 %v159, %v157
        %v161 = vmul.f32 %v160, 0.25
        %162 = vst [vmem:[%s153] sm:$0xff] %v161
        %s163 = sand.u32 %s68, 1
        %s164 = scalar_lea.sflag [#allocation4], %s163
        %s165 = sand.u32 %s68, 1
        %s166 = smul.addr %s165, 8
        %s167 = scalar_lea.vmem [#allocation5], %s166
        // Predicated region
        $region29: #{tpu_custom_call.1} parent=23 // pred_check
          %p168 = pneg %p78
        $region30: #{tpu_custom_call.1} parent=23 // pred_check_branch
          %170 = sbr.rel (%p168) target = $region32
        $region31: #{tpu_custom_call.1} parent=23 // pred_region
          %172 = vsyncadd %s164, 0
          %s173 = sadd.s32 %s23, %s22
          %s174 = smul.addr %s173, 8
          %s175 = scalar_lea.hbm %s1, %s174
          %s177 = sshll.u32 %s167, 4
          %s178 = int_to_ptr.vmem [resolvable:$true] %s177
          %s179 = sshll.u32 %s175, 4
          %s180 = int_to_ptr.hbm [resolvable:$true] %s179
          %182 = dma.vmem_to_hbm [thread:$0]  %s178, 128, %s180, %s164
        $region32: #{tpu_custom_call.1} parent=23 // pred_fallthru
          _
      $region24: #{tpu_custom_call.1} parent=5 // pred_fallthru
        _
      %p183 = scmp.le.s32.totalorder 2, %s13
      // Predicated region
      $region33: #{tpu_custom_call.1} parent=5 // pred_check
        %p184 = pneg %p183
      $region34: #{tpu_custom_call.1} parent=5 // pred_check_branch
        %186 = sbr.rel (%p184) target = $region36
      $region35: #{tpu_custom_call.1} parent=5 // pred_region
        %s187 = ssub.s32 %s13, 2
        // Predicated region
        $region37: #{tpu_custom_call.1} parent=35 // pred_check
          %p188 = pneg %p84
        $region38: #{tpu_custom_call.1} parent=35 // pred_check_branch
          %190 = sbr.rel (%p188) target = $region40
        $region39: #{tpu_custom_call.1} parent=35 // pred_region
          %s191 = sand.u32 %s69, 1
          %s192 = scalar_lea.sflag [#allocation4], %s191
          %s193 = sand.u32 %s69, 1
          %s194 = smul.addr %s193, 8
          %s195 = scalar_lea.vmem [#allocation5], %s194
          %197 = dma.done %s192, 128
        $region40: #{tpu_custom_call.1} parent=35 // pred_fallthru
          _
      $region36: #{tpu_custom_call.1} parent=5 // pred_fallthru
        _
    $region6: #{tpu_custom_call.1} parent=1 // loop_footer
      %s17 = sadd.s32 1, %s13
    $region7: #{tpu_custom_call.1} parent=1 // loop_footer_branch
      %12 = sbr.rel target = $region3
    $region8: #{tpu_custom_call.1} parent=1 // loop_exit
      _
    %198 = vsyncpa [#allocation3], 1
    %s199 = scalar_lea.sflag [#allocation3], 1
    %200 = vsyncpa %s199, 1
    %201 = vsyncpa [#allocation4], 1
    %s202 = scalar_lea.sflag [#allocation4], 1
    %203 = vsyncpa %s202, 1

</llo_original>
